<compile_context>
chip_gen: v7x
topology: tpu7x:2x2x1
jax: 0.10.0
libtpu: 0.0.40
codegen_flags: <defaults>
</compile_context>

<pallas_src>
import functools

import jax
import jax.numpy as jnp
import numpy as np
from jax.experimental import pallas as pl
from jax.experimental.pallas import tpu as pltpu

EPS = 1e-16


def _round_up(x, m):
    return (x + m - 1) // m * m


def _tpu_generation():
    """Best-effort device-generation probe; conservative defaults when unknown."""
    kind = ""
    try:
        kind = jax.devices()[0].device_kind.lower()
    except Exception:
        pass
    is_v7 = "v7" in kind
    return dict(
        num_tc=2 if is_v7 else 1,
        # v7x: 64 MiB VMEM per TC; v5e/v6e: 128 MiB.  Unknown -> conservative.
        vmem_cap=(48 << 20) if (is_v7 or not kind) else (96 << 20),
        onehot_cap=(2 << 20) if (is_v7 or not kind) else (4 << 20),
        # bf16 MXU operands by default only where the VPU has bf16 ALUs (v6e/v7x);
        # on v5e the bool->bf16 one-hot cast would be emulated on the binding VALU.
        default_bf16=("v6" in kind) or is_v7,
    )


def _pool_kernel_tr(seg_ref, val_ref, out_ref, acc_ref, *, approx):
    """Transposed orientation (d < 128): out/acc lane dim is the segment tile.

    seg_ref: (nnz_t, 1) int32, val_ref: (nnz_t, d+1) with a trailing ones column,
    out_ref: (d, seg_t) f32, acc_ref: (d+1, seg_t) f32 (row d carries the counts).
    """
    k = pl.program_id(1)

    @pl.when(k == 0)
    def _init():
        acc_ref[...] = jnp.zeros_like(acc_ref)

    d = out_ref.shape[0]
    seg_t = out_ref.shape[1]
    nnz_t = val_ref.shape[0]

    # Rebase ids once (O(nnz_t)); the iota is program_id-independent and the
    # compare + single cast are the only O(nnz_t*seg_t) VALU work per step.
    seg_local = seg_ref[...] - pl.program_id(0) * seg_t          # (nnz_t, 1)
    cols = jax.lax.broadcasted_iota(jnp.int32, (nnz_t, seg_t), 1)
    onehot = (seg_local == cols).astype(val_ref.dtype)           # (nnz_t, seg_t)

    # One MXU matmul yields per-segment sums AND counts (ones column); contraction
    # over nnz on both operands, f32 accumulation via preferred_element_type.
    dnums = (((0,), (0,)), ((), ()))
    acc_ref[...] += jax.lax.dot_general(val_ref[...], onehot, dnums,
                                        preferred_element_type=jnp.float32)

    @pl.when(k == pl.num_programs(1) - 1)
    def _finalize():
        acc = acc_ref[...]
        cnt = acc[d:d + 1, :]                                    # (1, seg_t)
        if approx:
            out_ref[...] = acc[:d, :] * pl.reciprocal(cnt + EPS, approx=True)
        else:
            out_ref[...] = acc[:d, :] / (cnt + EPS)              # exact PyTorch parity


def _pool_kernel_nat(seg_ref, val_ref, out_ref, sum_ref, cnt_ref, *, approx):
    """Natural orientation (d >= 128): writes (seg_t, d) directly, no wrapper transpose.

    seg_ref: (1, nnz_t) int32 lane-major, val_ref: (nnz_t, d),
    out_ref/sum_ref: (seg_t, d) f32, cnt_ref: (seg_t, 1) f32.
    """
    k = pl.program_id(1)

    @pl.when(k == 0)
    def _init():
        sum_ref[...] = jnp.zeros_like(sum_ref)
        cnt_ref[...] = jnp.zeros_like(cnt_ref)

    seg_t = out_ref.shape[0]
    nnz_t = val_ref.shape[0]

    seg_local = seg_ref[...] - pl.program_id(0) * seg_t          # (1, nnz_t)
    rows = jax.lax.broadcasted_iota(jnp.int32, (seg_t, nnz_t), 0)
    mask = seg_local == rows                                     # (seg_t, nnz_t)

    sum_ref[...] += jnp.dot(mask.astype(val_ref.dtype), val_ref[...],
                            preferred_element_type=jnp.float32)
    # Counts via an f32 XLU lane-reduce (slot is otherwise idle here); stays exact.
    cnt_ref[...] += jnp.sum(mask.astype(jnp.float32), axis=1, keepdims=True)

    @pl.when(k == pl.num_programs(1) - 1)
    def _finalize():
        cnt = cnt_ref[...]
        if approx:
            out_ref[...] = sum_ref[...] * pl.reciprocal(cnt + EPS, approx=True)
        else:
            out_ref[...] = sum_ref[...] / (cnt + EPS)


def pool_reduce(indices, values, sparse_shape, axis=0, *,
                use_bf16=None, approx_reciprocal=False,
                max_seg_tile=2048, max_nnz_tile=1024):
    """Segment-mean pooling of COO `values` over sparse dim `axis`.

    indices: (2, nnz) int32, assumed coalesced (duplicates are counted per entry).
    values:  (nnz, d) float.
    Returns dense (sparse_shape[1-axis], d) float32 = segment_sum / (count + 1e-16).
    use_bf16=None -> auto (bf16 MXU operands on v6e/v7x, f32 elsewhere).
    """
    nnz, d = values.shape
    num_seg = int(sparse_shape[1 - axis])
    seg_ids = indices[1 - axis].astype(jnp.int32)

    hw = _tpu_generation()
    if use_bf16 is None:
        use_bf16 = hw["default_bf16"]
    compute_dtype = jnp.bfloat16 if use_bf16 else jnp.float32
    itemsize = 2 if use_bf16 else 4
    natural = d >= 128   # wide values: natural orientation, no wrapper transpose

    # ---- tile selection ------------------------------------------------------
    nnz_ext = _round_up(max(nnz, 1), 128)
    seg_ext = _round_up(max(num_seg, 1), 128)
    nnz_tile = min(_round_up(max_nnz_tile, 128), nnz_ext)
    seg_tile = min(_round_up(max_seg_tile, 128), seg_ext)

    # v7x (2 TCs): keep >= 2 blocks on the "parallel" segment axis so both cores
    # are fed (worth one extra values pass at 3.2 TB/s HBM).  Single-TC v5e/v6e
    # prefer one fat segment tile -> values streamed from HBM exactly once.
    if hw["num_tc"] > 1 and seg_ext >= 2 * 128:
        seg_tile = min(seg_tile, max(128, (seg_ext // (2 * 128)) * 128))

    # Cap the one-hot temp (dominant per-step VMEM term); shrink nnz_tile first
    # (cheap: more steps), only then the seg tile (costly: values re-streaming).
    while nnz_tile > 128 and nnz_tile * seg_tile > hw["onehot_cap"]:
        nnz_tile -= 128
    while seg_tile > 128 and nnz_tile * seg_tile > hw["onehot_cap"]:
        seg_tile -= 128

    # Pad extents UP to tile multiples (instead of forcing the tile to divide the
    # 128-rounded extent, which degenerates to 128-wide tiles for prime-ish sizes).
    nnz_pad = _round_up(nnz, nnz_tile)
    seg_pad = _round_up(num_seg, seg_tile)
    grid = (seg_pad // seg_tile, nnz_pad // nnz_tile)

    # ---- operand prep (one fused XLA pass: cast + ones column + row padding) --
    vals = values.astype(compute_dtype)
    if not natural:
        # Trailing ones column -> counts come out of the same MXU matmul.
        vals = jnp.concatenate([vals, jnp.ones((nnz, 1), compute_dtype)], axis=1)
    if nnz_pad != nnz:
        pad = nnz_pad - nnz
        seg_ids = jnp.concatenate([seg_ids, jnp.full((pad,), -1, jnp.int32)])
        vals = jnp.concatenate(
            [vals, jnp.zeros((pad, vals.shape[1]), compute_dtype)], axis=0)
    d_in = vals.shape[1]

    # ---- explicit, generation-aware VMEM budget --------------------------------
    onehot_b = nnz_tile * seg_tile * (itemsize + 4)              # bool mask + cast operand
    vals_b = 2 * nnz_tile * _round_up(d_in, 128) * itemsize      # double-buffered tiles
    if natural:
        seg_b = 2 * 8 * nnz_tile * 4                             # (1, nnz_t) sublane-padded
        acc_b = seg_tile * (_round_up(d, 128) + 128) * 4
        out_b = 2 * seg_tile * _round_up(d, 128) * 4
    else:
        seg_b = 2 * nnz_tile * 128 * 4                           # (nnz_t, 1) lane-padded
        acc_b = _round_up(d_in, 8) * seg_tile * 4
        out_b = 2 * _round_up(d, 8) * seg_tile * 4
    need = onehot_b + vals_b + seg_b + acc_b + out_b
    vmem_limit = int(min(max(need * 3 // 2 + (4 << 20), 32 << 20), hw["vmem_cap"]))

    compiler_params = pltpu.CompilerParams(
        dimension_semantics=("parallel", "arbitrary"),
        vmem_limit_bytes=vmem_limit)

    if natural:
        out = pl.pallas_call(
            functools.partial(_pool_kernel_nat, approx=approx_reciprocal),
            out_shape=jax.ShapeDtypeStruct((seg_pad, d), jnp.float32),
            grid_spec=pltpu.PrefetchScalarGridSpec(
                num_scalar_prefetch=0,
                grid=grid,
                in_specs=[pl.BlockSpec((1, nnz_tile), lambda j, k: (0, k)),
                          pl.BlockSpec((nnz_tile, d), lambda j, k: (k, 0))],
                out_specs=pl.BlockSpec((seg_tile, d), lambda j, k: (j, 0)),
                scratch_shapes=[pltpu.VMEM((seg_tile, d), jnp.float32),
                                pltpu.VMEM((seg_tile, 1), jnp.float32)],
            ),
            compiler_params=compiler_params,
        )(seg_ids.reshape(1, nnz_pad), vals)
        return out[:num_seg, :]

    out_t = pl.pallas_call(
        functools.partial(_pool_kernel_tr, approx=approx_reciprocal),
        out_shape=jax.ShapeDtypeStruct((d, seg_pad), jnp.float32),
        grid_spec=pltpu.PrefetchScalarGridSpec(
            num_scalar_prefetch=0,
            grid=grid,
            in_specs=[pl.BlockSpec((nnz_tile, 1), lambda j, k: (k, 0)),
                      pl.BlockSpec((nnz_tile, d_in), lambda j, k: (k, 0))],
            out_specs=pl.BlockSpec((d, seg_tile), lambda j, k: (0, j)),
            scratch_shapes=[pltpu.VMEM((d_in, seg_tile), jnp.float32)],
        ),
        compiler_params=compiler_params,
    )(seg_ids.reshape(nnz_pad, 1), vals)
    # Layout plumbing only (tiny for d < 128): drop padding, back to (num_seg, d).
    return out_t[:, :num_seg].T


def _reference(indices, values, sparse_shape, axis=0):
    seg = indices[1 - axis]
    num_seg = int(sparse_shape[1 - axis])
    sums = jax.ops.segment_sum(values.astype(jnp.float32), seg, num_segments=num_seg)
    counts = jax.ops.segment_sum(jnp.ones((values.shape[0],), jnp.float32), seg,
                                 num_segments=num_seg)
    return sums / (counts[:, None] + EPS)


if __name__ == "__main__":
    key = jax.random.PRNGKey(0)
    N, M, nnz, d = 16, 16, 64, 8          # sparse matrix (N, M), hybrid value dim d

    # deterministic, duplicate-free COO indices (== already coalesced)
    k_idx, k_val = jax.random.split(key)
    lin = jax.random.permutation(k_idx, N * M)[:nnz]
    rows = (lin // M).astype(jnp.int32)
    cols = (lin % M).astype(jnp.int32)
    indices = jnp.stack([rows, cols], axis=0)            # (2, nnz)
    values = jax.random.normal(k_val, (nnz, d), dtype=jnp.float32)

    ref0 = _reference(indices, values, (N, M), axis=0)
    ref1 = _reference(indices, values, (N, M), axis=1)

    # f32 operands, exact divide (default). Tolerance covers MXU default-precision
    # f32 matmul rounding; counts are exact (f32 accumulation of exact 1.0 products).
    out0 = jax.block_until_ready(pool_reduce(indices, values, (N, M), axis=0, use_bf16=False))
    out1 = jax.block_until_ready(pool_reduce(indices, values, (N, M), axis=1, use_bf16=False))
    np.testing.assert_allclose(np.asarray(out0), np.asarray(ref0), rtol=2e-3, atol=2e-3)
    np.testing.assert_allclose(np.asarray(out1), np.asarray(ref1), rtol=2e-3, atol=2e-3)

    # Generation-default operand dtype (bf16 on v6e/v7x) + approx EUP reciprocal.
    out_fast = jax.block_until_ready(
        pool_reduce(indices, values, (N, M), axis=0, approx_reciprocal=True))
    np.testing.assert_allclose(np.asarray(out_fast), np.asarray(ref0), rtol=5e-2, atol=5e-2)

    # Explicit bf16 MXU-operand path.
    out_bf = jax.block_until_ready(
        pool_reduce(indices, values, (N, M), axis=0, use_bf16=True))
    np.testing.assert_allclose(np.asarray(out_bf), np.asarray(ref0), rtol=5e-2, atol=5e-2)

    # Wide value dim (d >= 128) -> natural orientation path (no wrapper transpose).
    d_wide = 128
    values_wide = jax.random.normal(k_val, (nnz, d_wide), dtype=jnp.float32)
    out_wide = jax.block_until_ready(
        pool_reduce(indices, values_wide, (N, M), axis=0, use_bf16=False))
    ref_wide = _reference(indices, values_wide, (N, M), axis=0)
    np.testing.assert_allclose(np.asarray(out_wide), np.asarray(ref_wide), rtol=2e-3, atol=2e-3)

    print("KERNEL_OK")
</pallas_src>

<mosaic_0001>
module attributes {stable_mosaic.version = 11 : i64} {
  func.func @_pool_kernel_tr(%arg0: i32, %arg1: i32, %arg2: memref<128x1xi32, #tpu.memory_space<vmem>>, %arg3: memref<128x9xf32, #tpu.memory_space<vmem>>, %arg4: memref<8x128xf32, #tpu.memory_space<vmem>>, %arg5: memref<9x128xf32, #tpu.memory_space<vmem>>) attributes {dimension_semantics = [#tpu.dimension_semantics<parallel>, #tpu.dimension_semantics<arbitrary>], iteration_bounds = array<i64: 1, 1>, scalar_prefetch = 0 : i64, scratch_operands = 1 : i64, tpu.core_type = #tpu.core_type<tc>, window_params = [{transform_indices = @transform_0, window_bounds = array<i64: 128, 1>}, {transform_indices = @transform_1, window_bounds = array<i64: 128, 9>}, {transform_indices = @transform_2, window_bounds = array<i64: 8, 128>}]} {
    %c0_i32 = arith.constant 0 : i32
    %0 = arith.cmpi eq, %arg1, %c0_i32 : i32
    %1 = arith.extui %0 : i1 to i32
    %c0_i32_0 = arith.constant 0 : i32
    %2 = arith.cmpi ne, %1, %c0_i32_0 : i32
    scf.if %2 {
      %cst_10 = arith.constant 0.000000e+00 : f32
      %20 = vector.broadcast %cst_10 : f32 to vector<9x128xf32>
      %c0_11 = arith.constant 0 : index
      %c0_12 = arith.constant 0 : index
      %21 = vector.load %arg5[%c0_11, %c0_12] : memref<9x128xf32, #tpu.memory_space<vmem>>, vector<9x128xf32>
      tpu.vector_store %arg5[%c0_11, %c0_12], %20 {strides = array<i32>} : memref<9x128xf32, #tpu.memory_space<vmem>>, vector<9x128xf32>,
    } else {
    }
    %c0 = arith.constant 0 : index
    %c0_1 = arith.constant 0 : index
    %3 = vector.load %arg2[%c0, %c0_1] : memref<128x1xi32, #tpu.memory_space<vmem>>, vector<128x1xi32>
    %c128_i32 = arith.constant 128 : i32
    %4 = arith.muli %arg0, %c128_i32 : i32
    %5 = vector.broadcast %4 : i32 to vector<128x1xi32>
    %6 = arith.subi %3, %5 : vector<128x1xi32>
    %7 = tpu.iota {dimensions = array<i32: 1>} : vector<128x128xi32>
    %8 = vector.broadcast %6 : vector<128x1xi32> to vector<128x128xi32>
    %9 = arith.cmpi eq, %8, %7 : vector<128x128xi32>
    %10 = arith.extui %9 : vector<128x128xi1> to vector<128x128xi32>
    %11 = arith.sitofp %10 : vector<128x128xi32> to vector<128x128xf32>
    %c0_2 = arith.constant 0 : index
    %c0_3 = arith.constant 0 : index
    %12 = vector.load %arg5[%c0_2, %c0_3] : memref<9x128xf32, #tpu.memory_space<vmem>>, vector<9x128xf32>
    %c0_4 = arith.constant 0 : index
    %c0_5 = arith.constant 0 : index
    %13 = vector.load %arg3[%c0_4, %c0_5] : memref<128x9xf32, #tpu.memory_space<vmem>>, vector<128x9xf32>
    %cst = arith.constant dense<0.000000e+00> : vector<9x128xf32>
    %14 = tpu.matmul %13, %11, %cst {dimension_numbers = #tpu.dot_dimension_numbers<[0], [0], [1], [1], [0, 1, 1, 1], [], []>} : vector<128x9xf32>, vector<128x128xf32>, vector<9x128xf32> -> vector<9x128xf32>
    %15 = arith.addf %12, %14 : vector<9x128xf32>
    %c0_6 = arith.constant 0 : index
    %c0_7 = arith.constant 0 : index
    %16 = vector.load %arg5[%c0_6, %c0_7] : memref<9x128xf32, #tpu.memory_space<vmem>>, vector<9x128xf32>
    tpu.vector_store %arg5[%c0_6, %c0_7], %15 {strides = array<i32>} : memref<9x128xf32, #tpu.memory_space<vmem>>, vector<9x128xf32>,
    %c0_i32_8 = arith.constant 0 : i32
    %17 = arith.cmpi eq, %arg1, %c0_i32_8 : i32
    %18 = arith.extui %17 : i1 to i32
    %c0_i32_9 = arith.constant 0 : i32
    %19 = arith.cmpi ne, %18, %c0_i32_9 : i32
    scf.if %19 {
      %c0_10 = arith.constant 0 : index
      %c0_11 = arith.constant 0 : index
      %20 = vector.load %arg5[%c0_10, %c0_11] : memref<9x128xf32, #tpu.memory_space<vmem>>, vector<9x128xf32>
      %21 = vector.extract_strided_slice %20 {offsets = [8, 0], sizes = [1, 128], strides = [1, 1]} : vector<9x128xf32> to vector<1x128xf32>
      %22 = vector.extract_strided_slice %20 {offsets = [0, 0], sizes = [8, 128], strides = [1, 1]} : vector<9x128xf32> to vector<8x128xf32>
      %cst_12 = arith.constant 1.000000e-16 : f32
      %23 = vector.broadcast %cst_12 : f32 to vector<1x128xf32>
      %24 = arith.addf %21, %23 : vector<1x128xf32>
      %25 = vector.broadcast %24 : vector<1x128xf32> to vector<8x128xf32>
      %26 = arith.divf %22, %25 : vector<8x128xf32>
      %c0_13 = arith.constant 0 : index
      %c0_14 = arith.constant 0 : index
      %27 = vector.load %arg4[%c0_13, %c0_14] : memref<8x128xf32, #tpu.memory_space<vmem>>, vector<8x128xf32>
      tpu.vector_store %arg4[%c0_13, %c0_14], %26 {strides = array<i32>} : memref<8x128xf32, #tpu.memory_space<vmem>>, vector<8x128xf32>,
    } else {
    }
    return
  }
  func.func @transform_0(%arg0: i32, %arg1: i32) -> (i32, i32) {
    %c0_i32 = arith.constant 0 : i32
    %c0_i32_0 = arith.constant 0 : i32
    return %arg1, %c0_i32 : i32, i32
  }
  func.func @transform_1(%arg0: i32, %arg1: i32) -> (i32, i32) {
    %c0_i32 = arith.constant 0 : i32
    %c0_i32_0 = arith.constant 0 : i32
    return %arg1, %c0_i32 : i32, i32
  }
  func.func @transform_2(%arg0: i32, %arg1: i32) -> (i32, i32) {
    %c0_i32 = arith.constant 0 : i32
    %c0_i32_0 = arith.constant 0 : i32
    return %c0_i32, %arg0 : i32, i32
  }
}

</mosaic_0001>

<llo_original>
// kernel: tpu_custom_call.1
$region0: #{tpu_custom_call.1}
  #allocation0 [shape = 'u32[]', space=smem, size = 0x4, offset = 0x4, fixed_abs, tag = 'smem constant byte address 0x4 - core index']
  #allocation1 [shape = 'u32[144,128]{1,0:T(1,128)}', space=vmem, size = 0x12000, scoped, tag = 'internal scratch']
  #allocation2 [shape = 'f32[9,128]{1,0:T(8,128)}', space=vmem, size = 0x2000, scoped, tag = 'scratch operand']
  %s0 = inlined_call_operand.vmem [shape: s32[128,1], index: 0, kind: input, shape index: {}]
  %s1 = inlined_call_operand.vmem [shape: f32[128,9], index: 1, kind: input, shape index: {}]
  %s2 = inlined_call_operand.hbm [shape: f32[8,128], index: 2, kind: output, shape index: {}]
  %s3 = sld [smem:[#allocation0]]
  $region26: #{tpu_custom_call.1} parent=0
    _
  %s5 = ssub.s32 1, %s3
  %s6 = scalar_select 0, %s5, %s3
  $region1: #{tpu_custom_call.1} parent=0
    #allocation3 [shape = 'u8[4096]{0}', space=vmem, size = 0x1000, scoped, tag = 'output window, operand 0, single buffered']
    #allocation4 [shape = 's32[1]{0}', space=sflag, size = 0x4, scoped, tag = 'scoped memory for tpu_custom_call.1']
    %7 = vsyncpa [#allocation4], 0
    // Predicated region
    $region2: #{tpu_custom_call.1} parent=1 // pred_check
      _
    $region3: #{tpu_custom_call.1} parent=1 // pred_check_branch
      %9 = sbr.rel (0) target = $region5
    $region4: #{tpu_custom_call.1} parent=1 // pred_region
      _
    $region5: #{tpu_custom_call.1} parent=1 // pred_fallthru
      _
    // Predicated region
    $region6: #{tpu_custom_call.1} parent=1 // pred_check
      _
    $region7: #{tpu_custom_call.1} parent=1 // pred_check_branch
      %11 = sbr.rel (0) target = $region9
    $region8: #{tpu_custom_call.1} parent=1 // pred_region
      _
    $region9: #{tpu_custom_call.1} parent=1 // pred_fallthru
      _
    %p12 = scmp.eq.s32.totalorder 0, 0
    // Predicated region
    $region10: #{tpu_custom_call.1} parent=1 // pred_check
      %p13 = pneg %p12
    $region11: #{tpu_custom_call.1} parent=1 // pred_check_branch
      %15 = sbr.rel (%p13) target = $region13
    $region12: #{tpu_custom_call.1} parent=1 // pred_region
      %16 = vst [vmem:[#allocation2] sm:$0xff] 0.0
      %17 = vst [vmem:[#allocation2 + $0x8] sm:$0x1] 0.0
    $region13: #{tpu_custom_call.1} parent=1 // pred_fallthru
      _
    %v18 = vld [vmem:[%s0] sm:$0xff]
    %v19 = vld [vmem:[%s0 + $0x8] sm:$0xff]
    %v20 = vld [vmem:[%s0 + $0x10] sm:$0xff]
    %v21 = vld [vmem:[%s0 + $0x18] sm:$0xff]
    %v22 = vld [vmem:[%s0 + $0x20] sm:$0xff]
    %v23 = vld [vmem:[%s0 + $0x28] sm:$0xff]
    %v24 = vld [vmem:[%s0 + $0x30] sm:$0xff]
    %v25 = vld [vmem:[%s0 + $0x38] sm:$0xff]
    %v26 = vld [vmem:[%s0 + $0x40] sm:$0xff]
    %v27 = vld [vmem:[%s0 + $0x48] sm:$0xff]
    %v28 = vld [vmem:[%s0 + $0x50] sm:$0xff]
    %v29 = vld [vmem:[%s0 + $0x58] sm:$0xff]
    %v30 = vld [vmem:[%s0 + $0x60] sm:$0xff]
    %v31 = vld [vmem:[%s0 + $0x68] sm:$0xff]
    %v32 = vld [vmem:[%s0 + $0x70] sm:$0xff]
    %v33 = vld [vmem:[%s0 + $0x78] sm:$0xff]
    %s34 = smul.u32 0, 128
    %v35 = vstv %s34
    %v36 = vsub.s32 %v18, %v35
    %v37 = vsub.s32 %v19, %v35
    %v38 = vsub.s32 %v20, %v35
    %v39 = vsub.s32 %v21, %v35
    %v40 = vsub.s32 %v22, %v35
    %v41 = vsub.s32 %v23, %v35
    %v42 = vsub.s32 %v24, %v35
    %v43 = vsub.s32 %v25, %v35
    %v44 = vsub.s32 %v26, %v35
    %v45 = vsub.s32 %v27, %v35
    %v46 = vsub.s32 %v28, %v35
    %v47 = vsub.s32 %v29, %v35
    %v48 = vsub.s32 %v30, %v35
    %v49 = vsub.s32 %v31, %v35
    %v50 = vsub.s32 %v32, %v35
    %v51 = vsub.s32 %v33, %v35
    %v52 = vlaneseq
    %v53 = vand.u32 %v52, 127
    %54 = vset.pattern.permute.xlu0 0
    %55 = vperm.xlu0 %54, %v36
    %v56 = vpop.permute.xlu0 %55
    %57 = vset.pattern.permute.xlu0 0
    %58 = vperm.xlu0 %57, %v37
    %v59 = vpop.permute.xlu0 %58
    %60 = vset.pattern.permute.xlu0 0
    %61 = vperm.xlu0 %60, %v38
    %v62 = vpop.permute.xlu0 %61
    %63 = vset.pattern.permute.xlu0 0
    %64 = vperm.xlu0 %63, %v39
    %v65 = vpop.permute.xlu0 %64
    %66 = vset.pattern.permute.xlu0 0
    %67 = vperm.xlu0 %66, %v40
    %v68 = vpop.permute.xlu0 %67
    %69 = vset.pattern.permute.xlu0 0
    %70 = vperm.xlu0 %69, %v41
    %v71 = vpop.permute.xlu0 %70
    %72 = vset.pattern.permute.xlu0 0
    %73 = vperm.xlu0 %72, %v42
    %v74 = vpop.permute.xlu0 %73
    %75 = vset.pattern.permute.xlu0 0
    %76 = vperm.xlu0 %75, %v43
    %v77 = vpop.permute.xlu0 %76
    %78 = vset.pattern.permute.xlu0 0
    %79 = vperm.xlu0 %78, %v44
    %v80 = vpop.permute.xlu0 %79
    %81 = vset.pattern.permute.xlu0 0
    %82 = vperm.xlu0 %81, %v45
    %v83 = vpop.permute.xlu0 %82
    %84 = vset.pattern.permute.xlu0 0
    %85 = vperm.xlu0 %84, %v46
    %v86 = vpop.permute.xlu0 %85
    %87 = vset.pattern.permute.xlu0 0
    %88 = vperm.xlu0 %87, %v47
    %v89 = vpop.permute.xlu0 %88
    %90 = vset.pattern.permute.xlu0 0
    %91 = vperm.xlu0 %90, %v48
    %v92 = vpop.permute.xlu0 %91
    %93 = vset.pattern.permute.xlu0 0
    %94 = vperm.xlu0 %93, %v49
    %v95 = vpop.permute.xlu0 %94
    %96 = vset.pattern.permute.xlu0 0
    %97 = vperm.xlu0 %96, %v50
    %v98 = vpop.permute.xlu0 %97
    %99 = vset.pattern.permute.xlu0 0
    %100 = vperm.xlu0 %99, %v51
    %v101 = vpop.permute.xlu0 %100
    %vm102 = vcmp.eq.s32.totalorder %v56, %v53
    %vm103 = vcmp.eq.s32.totalorder %v59, %v53
    %vm104 = vcmp.eq.s32.totalorder %v62, %v53
    %vm105 = vcmp.eq.s32.totalorder %v65, %v53
    %vm106 = vcmp.eq.s32.totalorder %v68, %v53
    %vm107 = vcmp.eq.s32.totalorder %v71, %v53
    %vm108 = vcmp.eq.s32.totalorder %v74, %v53
    %vm109 = vcmp.eq.s32.totalorder %v77, %v53
    %vm110 = vcmp.eq.s32.totalorder %v80, %v53
    %vm111 = vcmp.eq.s32.totalorder %v83, %v53
    %vm112 = vcmp.eq.s32.totalorder %v86, %v53
    %vm113 = vcmp.eq.s32.totalorder %v89, %v53
    %vm114 = vcmp.eq.s32.totalorder %v92, %v53
    %vm115 = vcmp.eq.s32.totalorder %v95, %v53
    %vm116 = vcmp.eq.s32.totalorder %v98, %v53
    %vm117 = vcmp.eq.s32.totalorder %v101, %v53
    %v118 = vsel %vm102, 1, 0
    %v119 = vsel %vm103, 1, 0
    %v120 = vsel %vm104, 1, 0
    %v121 = vsel %vm105, 1, 0
    %v122 = vsel %vm106, 1, 0
    %v123 = vsel %vm107, 1, 0
    %v124 = vsel %vm108, 1, 0
    %v125 = vsel %vm109, 1, 0
    %v126 = vsel %vm110, 1, 0
    %v127 = vsel %vm111, 1, 0
    %v128 = vsel %vm112, 1, 0
    %v129 = vsel %vm113, 1, 0
    %v130 = vsel %vm114, 1, 0
    %v131 = vsel %vm115, 1, 0
    %v132 = vsel %vm116, 1, 0
    %v133 = vsel %vm117, 1, 0
    %v134 = vcvt.s32.f32 %v118
    %v135 = vcvt.s32.f32 %v119
    %v136 = vcvt.s32.f32 %v120
    %v137 = vcvt.s32.f32 %v121
    %v138 = vcvt.s32.f32 %v122
    %v139 = vcvt.s32.f32 %v123
    %v140 = vcvt.s32.f32 %v124
    %v141 = vcvt.s32.f32 %v125
    %v142 = vcvt.s32.f32 %v126
    %v143 = vcvt.s32.f32 %v127
    %v144 = vcvt.s32.f32 %v128
    %v145 = vcvt.s32.f32 %v129
    %v146 = vcvt.s32.f32 %v130
    %v147 = vcvt.s32.f32 %v131
    %v148 = vcvt.s32.f32 %v132
    %v149 = vcvt.s32.f32 %v133
    %v150 = vld [vmem:[#allocation2] sm:$0xff]
    %v151 = vld [vmem:[#allocation2 + $0x8] sm:$0x1]
    %v152 = vld [vmem:[%s1] sm:$0xff]
    %v153 = vld [vmem:[%s1 + $0x8] sm:$0xff]
    %v154 = vld [vmem:[%s1 + $0x10] sm:$0xff]
    %v155 = vld [vmem:[%s1 + $0x18] sm:$0xff]
    %v156 = vld [vmem:[%s1 + $0x20] sm:$0xff]
    %v157 = vld [vmem:[%s1 + $0x28] sm:$0xff]
    %v158 = vld [vmem:[%s1 + $0x30] sm:$0xff]
    %v159 = vld [vmem:[%s1 + $0x38] sm:$0xff]
    %v160 = vld [vmem:[%s1 + $0x40] sm:$0xff]
    %v161 = vld [vmem:[%s1 + $0x48] sm:$0xff]
    %v162 = vld [vmem:[%s1 + $0x50] sm:$0xff]
    %v163 = vld [vmem:[%s1 + $0x58] sm:$0xff]
    %v164 = vld [vmem:[%s1 + $0x60] sm:$0xff]
    %v165 = vld [vmem:[%s1 + $0x68] sm:$0xff]
    %v166 = vld [vmem:[%s1 + $0x70] sm:$0xff]
    %v167 = vld [vmem:[%s1 + $0x78] sm:$0xff]
    %168 = vxpose.xlu0.b32.start [1/16] %v152, 128
    %169 = vxpose.xlu0.b32.cont [2/16] %v153, 128
    %170 = vxpose.xlu0.b32.cont [3/16] %v154, 128
    %171 = vxpose.xlu0.b32.cont [4/16] %v155, 128
    %172 = vxpose.xlu0.b32.cont [5/16] %v156, 128
    %173 = vxpose.xlu0.b32.cont [6/16] %v157, 128
    %174 = vxpose.xlu0.b32.cont [7/16] %v158, 128
    %175 = vxpose.xlu0.b32.cont [8/16] %v159, 128
    %176 = vxpose.xlu0.b32.cont [9/16] %v160, 128
    %177 = vxpose.xlu0.b32.cont [10/16] %v161, 128
    %178 = vxpose.xlu0.b32.cont [11/16] %v162, 128
    %179 = vxpose.xlu0.b32.cont [12/16] %v163, 128
    %180 = vxpose.xlu0.b32.cont [13/16] %v164, 128
    %181 = vxpose.xlu0.b32.cont [14/16] %v165, 128
    %182 = vxpose.xlu0.b32.cont [15/16] %v166, 128
    %183 = vxpose.xlu0.b32.end [16/16] %v167, 128
    %v184 = vpop.trf.xlu0
    %v185 = vpop.trf.xlu0
    %v186 = vpop.trf.xlu0
    %v187 = vpop.trf.xlu0
    %v188 = vpop.trf.xlu0
    %v189 = vpop.trf.xlu0
    %v190 = vpop.trf.xlu0
    %v191 = vpop.trf.xlu0
    %v192 = vpop.trf.xlu0
    %v193 = vpop.trf.xlu0
    %v194 = vpop.trf.xlu0
    %v195 = vpop.trf.xlu0
    %v196 = vpop.trf.xlu0
    %v197 = vpop.trf.xlu0
    %v198 = vpop.trf.xlu0
    %v199 = vpop.trf.xlu0
    %200 = vmatprep.subr.mxu0 0.0
    %201 = vmatpush1.msra.mxu0 %v134
    %202 = vmatprep.subr.mxu0 0.0
    %203 = vmatpush1.msra.mxu0 %v135
    %204 = vmatprep.subr.mxu0 0.0
    %205 = vmatpush1.msra.mxu0 %v136
    %206 = vmatprep.subr.mxu0 0.0
    %207 = vmatpush1.msra.mxu0 %v137
    %208 = vmatprep.subr.mxu0 0.0
    %209 = vmatpush1.msra.mxu0 %v138
    %210 = vmatprep.subr.mxu0 0.0
    %211 = vmatpush1.msra.mxu0 %v139
    %212 = vmatprep.subr.mxu0 0.0
    %213 = vmatpush1.msra.mxu0 %v140
    %214 = vmatprep.subr.mxu0 0.0
    %215 = vmatpush1.msra.mxu0 %v141
    %216 = vmatprep.subr.mxu0 0.0
    %217 = vmatpush1.msra.mxu0 %v142
    %218 = vmatprep.subr.mxu0 0.0
    %219 = vmatpush1.msra.mxu0 %v143
    %220 = vmatprep.subr.mxu0 0.0
    %221 = vmatpush1.msra.mxu0 %v144
    %222 = vmatprep.subr.mxu0 0.0
    %223 = vmatpush1.msra.mxu0 %v145
    %224 = vmatprep.subr.mxu0 0.0
    %225 = vmatpush1.msra.mxu0 %v146
    %226 = vmatprep.subr.mxu0 0.0
    %227 = vmatpush1.msra.mxu0 %v147
    %228 = vmatprep.subr.mxu0 0.0
    %229 = vmatpush1.msra.mxu0 %v148
    %230 = vmatprep.subr.mxu0 0.0
    %231 = vmatpush1.msra.mxu0 %v149
    %232 = vmatprep.subr.mxu0 0.0
    %233 = vmatpush1.msra.mxu0 0.0
    %234 = vmatprep.subr.mxu0 0.0
    %235 = vmatpush1.msra.mxu0 0.0
    %236 = vmatprep.subr.mxu0 0.0
    %237 = vmatpush1.msra.mxu0 0.0
    %238 = vmatprep.subr.mxu0 0.0
    %239 = vmatpush1.msra.mxu0 0.0
    %240 = vmatprep.subr.mxu0 0.0
    %241 = vmatpush1.msra.mxu0 0.0
    %242 = vmatprep.subr.mxu0 0.0
    %243 = vmatpush1.msra.mxu0 0.0
    %244 = vmatprep.subr.mxu0 0.0
    %245 = vmatpush1.msra.mxu0 0.0
    %246 = vmatprep.subr.mxu0 0.0
    %247 = vmatpush1.msra.mxu0 0.0
    %248 = vmatprep.subr.mxu0 0.0
    %249 = vmatpush1.msra.mxu0 0.0
    %250 = vmatprep.subr.mxu0 0.0
    %251 = vmatpush1.msra.mxu0 0.0
    %252 = vmatprep.subr.mxu0 0.0
    %253 = vmatpush1.msra.mxu0 0.0
    %254 = vmatprep.subr.mxu0 0.0
    %255 = vmatpush1.msra.mxu0 0.0
    %256 = vmatprep.subr.mxu0 0.0
    %257 = vmatpush1.msra.mxu0 0.0
    %258 = vmatprep.subr.mxu0 0.0
    %259 = vmatpush1.msra.mxu0 0.0
    %260 = vmatprep.subr.mxu0 0.0
    %261 = vmatpush1.msra.mxu0 0.0
    %262 = vmatprep.subr.mxu0 0.0
    %263 = vmatpush1.msra.mxu0 0.0
    %264 = vmatprep.mubr.f32.mxu0 0.0
    %265 = vmatmul.mubr.f32.gmra.mrb[0].mxu0 %v184
    %v266 = vpop.f32.mrb[0].mxu0
    %v267 = vadd.f32 0.0, %v266
    %v268 = vpop.f32.mrb[0].mxu0
    %269 = vmatprep.mubr.f32.mxu0 0.0
    %270 = vmatmul.mubr.f32.gmra.mrb[0].mxu0 %v185
    %v271 = vpop.f32.mrb[0].mxu0
    %v272 = vadd.f32 0.0, %v271
    %v273 = vpop.f32.mrb[0].mxu0
    %274 = vdwg.mxu0
    %v275 = vadd.f32 %v150, %v267
    %v276 = vadd.f32 %v151, %v272
    %277 = vst [vmem:[#allocation2] sm:$0xff] %v275
    %278 = vst [vmem:[#allocation2 + $0x8] sm:$0x1] %v276
    // Predicated region
    $region14: #{tpu_custom_call.1} parent=1 // pred_check
      %p279 = pneg %p12
    $region15: #{tpu_custom_call.1} parent=1 // pred_check_branch
      %281 = sbr.rel (%p279) target = $region17
    $region16: #{tpu_custom_call.1} parent=1 // pred_region
      %v282 = vld [vmem:[#allocation2] sm:$0xff]
      %v283 = vld [vmem:[#allocation2 + $0x8] sm:$0x1]
      %v284 = vadd.f32 %v283, 1e-16
      %v285 = vlaneseq
      %v286 = vshrl.u32 %v285, 7
      %v287 = vsub.s32 0, %v286
      %v288 = vrot.slane %v284, %v287
      %v289 = vrcp.pop %v288
      %v290 = vmul.f32 %v282, %v289
      %291 = vst [vmem:[#allocation3] sm:$0xff] %v290
    $region17: #{tpu_custom_call.1} parent=1 // pred_fallthru
      _
    // Predicated region
    $region18: #{tpu_custom_call.1} parent=1 // pred_check
      _
    $region19: #{tpu_custom_call.1} parent=1 // pred_check_branch
      %293 = sbr.rel (0) target = $region21
    $region20: #{tpu_custom_call.1} parent=1 // pred_region
      %s295 = ssub.s32 128, 128
      %296 = vsyncadd [#allocation4], %s295
      %s298 = sshll.u32 [#allocation3], 4
      %s299 = int_to_ptr.vmem [resolvable:$true] %s298
      %301 = dma.vmem_to_hbm [thread:$0]  %s299, 128, %s2, [#allocation4]
    $region21: #{tpu_custom_call.1} parent=1 // pred_fallthru
      _
    // Predicated region
    $region22: #{tpu_custom_call.1} parent=1 // pred_check
      _
    $region23: #{tpu_custom_call.1} parent=1 // pred_check_branch
      %303 = sbr.rel (0) target = $region25
    $region24: #{tpu_custom_call.1} parent=1 // pred_region
      %304 = dma.done [#allocation4], 128
    $region25: #{tpu_custom_call.1} parent=1 // pred_fallthru
      _
    %305 = vsyncpa [#allocation4], 1

</llo_original>
